<compile_context>
chip_gen: v7x
topology: tpu7x:2x2x1
jax: 0.10.0
libtpu: 0.0.40
codegen_flags: <defaults>
</compile_context>

<pallas_src>
import functools

import jax
import jax.numpy as jnp
import numpy as np
from jax import lax
from jax.experimental import pallas as pl
from jax.experimental.pallas import tpu as pltpu


def _round_up(v, m):
    return ((v + m - 1) // m) * m


def _lastblock_kernel(x_ref, wconv_ref, bconv_ref, wlin_ref, blin_ref, o_ref,
                      *, dilation, mxu_dtype):
    # x_ref:     (Bt, C, L)  batch tile, channels on sublanes, time on lanes
    # wconv_ref: (C, K)      depthwise conv taps (per channel)
    # bconv_ref: (C, 1)      conv bias
    # wlin_ref:  (C, C)      Linear weight, PyTorch convention (y = W @ h + b)
    # blin_ref:  (C, 1)      Linear bias
    Bt, C, L = x_ref.shape
    K = wconv_ref.shape[1]

    # Hoist weight loads / broadcasts out of the per-batch loop (no CSE in JAX).
    wconv = wconv_ref[...].astype(jnp.float32)            # (C, K)
    bconv_bc = jnp.broadcast_to(
        bconv_ref[...].astype(jnp.float32), (C, L))       # (C, L)
    wlin = wlin_ref[...].astype(mxu_dtype)                # (C, C)
    blin = blin_ref[...].astype(jnp.float32)              # (C, 1)
    lane_idx = lax.broadcasted_iota(jnp.int32, (C, L), 1)

    for b in range(Bt):                                   # static unroll
        xf = x_ref[b].astype(jnp.float32)                 # (C, L)

        # Depthwise causal conv, f32 accumulation:
        #   out[c, t] = bconv[c] + sum_k wconv[c, k] * x[c, t - (K-1-k)*d]
        # (zero for negative time).  Residual (+x) is fused into the shift-0 tap.
        acc = bconv_bc
        for k in range(K):
            shift = (K - 1 - k) * dilation
            tap = wconv[:, k:k + 1]                       # (C, 1)
            if shift == 0:
                acc = acc + (tap + 1.0) * xf              # conv tap + residual
            elif shift < L:
                rolled = pltpu.roll(xf, shift, 1)         # XLU lane rotate
                shifted = jnp.where(lane_idx < shift, 0.0, rolled)
                acc = acc + tap * shifted
            # shift >= L: every source index is negative -> contributes zero.

        # Channel-mixing Linear on the MXU:
        #   y[o, t] = sum_c W[o, c] * h[c, t] + b[o]   (lane-dense along L)
        y = jnp.dot(wlin, acc.astype(mxu_dtype),
                    preferred_element_type=jnp.float32)
        o_ref[b] = (y + blin).astype(o_ref.dtype)


def lastblock_forward(x_ncl, wconv, bconv, wlin, blin, *, dilation,
                      batch_block=1, mxu_dtype=jnp.float32):
    """LastBlock forward.

    x_ncl: (N, C, L); wconv: (C, 1, K) depthwise Conv1d weight; bconv: (C,);
    wlin/blin: Linear(C, C) params.  Returns (N, C, L).
    On v6e/v7x pass mxu_dtype=jnp.bfloat16 to run the matmul operands in bf16
    (loosen verification tolerance accordingly).
    """
    N, C, L = x_ncl.shape
    K = wconv.shape[-1]
    itemsize = jnp.dtype(x_ncl.dtype).itemsize

    # Pad channels to a sublane multiple and length to a lane multiple (128) so
    # output stores are lane-dense (unmasked vst).  Zero padding is exact for
    # this op (causal conv + per-position linear); padded rows/cols are sliced off.
    sub = 8 if itemsize == 4 else 16
    Cp = _round_up(C, sub)
    Lp = _round_up(L, 128)

    if batch_block <= 0 or N % batch_block:
        batch_block = 1
    Bt = batch_block

    x_p = x_ncl
    if (Cp, Lp) != (C, L):
        x_p = jnp.pad(x_ncl, ((0, 0), (0, Cp - C), (0, Lp - L)))
    wconv_ck = wconv[:, 0, :]                             # (C, K) per-channel taps
    wlin_p, bconv_p, blin_p = wlin, bconv, blin
    if Cp != C:
        wconv_ck = jnp.pad(wconv_ck, ((0, Cp - C), (0, 0)))
        wlin_p = jnp.pad(wlin, ((0, Cp - C), (0, Cp - C)))
        bconv_p = jnp.pad(bconv, (0, Cp - C))
        blin_p = jnp.pad(blin, (0, Cp - C))

    kern = functools.partial(_lastblock_kernel, dilation=dilation,
                             mxu_dtype=mxu_dtype)

    # VMEM budget: in/out blocks double-buffered + f32 temporaries + weights.
    block_bytes = Bt * Cp * Lp * itemsize
    weight_bytes = (Cp * K + Cp * Cp + 2 * Cp) * itemsize
    vmem_need = 4 * block_bytes + 6 * Bt * Cp * Lp * 4 + 2 * weight_bytes
    vmem_limit = int(min(64 * 2**20, max(32 * 2**20, vmem_need)))
    # NOTE: for very long L on v7x (64 MiB VMEM) additionally tile L with a
    # (K-1)*dilation-row causal halo; not needed at these sizes.

    flops = int(2 * N * Cp * Lp * (K + Cp))
    bytes_accessed = int(2 * N * Cp * Lp * itemsize + weight_bytes)

    out_p = pl.pallas_call(
        kern,
        out_shape=jax.ShapeDtypeStruct((N, Cp, Lp), x_ncl.dtype),
        grid_spec=pltpu.PrefetchScalarGridSpec(
            num_scalar_prefetch=0,
            grid=(N // Bt,),
            in_specs=[
                pl.BlockSpec((Bt, Cp, Lp), lambda n: (n, 0, 0)),
                pl.BlockSpec((Cp, K), lambda n: (0, 0)),
                pl.BlockSpec((Cp, 1), lambda n: (0, 0)),
                pl.BlockSpec((Cp, Cp), lambda n: (0, 0)),
                pl.BlockSpec((Cp, 1), lambda n: (0, 0)),
            ],
            out_specs=pl.BlockSpec((Bt, Cp, Lp), lambda n: (n, 0, 0)),
        ),
        compiler_params=pltpu.CompilerParams(
            dimension_semantics=("parallel",),
            vmem_limit_bytes=vmem_limit),
        cost_estimate=pl.CostEstimate(flops=flops, transcendentals=0,
                                      bytes_accessed=bytes_accessed),
    )(x_p, wconv_ck, bconv_p.reshape(Cp, 1), wlin_p, blin_p.reshape(Cp, 1))

    if (Cp, Lp) != (C, L):
        out_p = out_p[:, :C, :L]
    return out_p


def _reference_forward(x, wconv, bconv, wlin, blin, *, dilation, padding):
    """Pure-JAX reference matching the PyTorch LastBlock.forward."""
    N, C, L = x.shape
    K = wconv.shape[-1]
    # conv1d(padding=P both sides) + chomp(P) == left-pad by P only.
    xp = jnp.pad(x, ((0, 0), (0, 0), (padding, 0)))
    conv = jnp.zeros((N, C, L), jnp.float32)
    for k in range(K):
        conv = conv + wconv[:, 0, k][None, :, None] * xp[:, :, k * dilation:k * dilation + L]
    conv = conv + bconv[None, :, None]
    h = jnp.transpose(conv + x, (0, 2, 1))                # (N, L, C)
    y = h @ wlin.T + blin
    return jnp.transpose(y, (0, 2, 1))


if __name__ == "__main__":
    # Module config (residual requires n_outputs == n_inputs, stride = 1 and
    # causal padding = (kernel_size - 1) * dilation).
    N, C, L = 2, 8, 16
    K, dilation, stride = 3, 2, 1
    padding = (K - 1) * dilation

    key = jax.random.PRNGKey(0)
    kx, kwc, kbc, kwl, kbl = jax.random.split(key, 5)

    x = jax.random.normal(kx, (N, C, L), jnp.float32)
    # Conv1d(n_inputs, n_outputs, K, groups=n_outputs) weight: (C, 1, K)
    wconv = jax.random.normal(kwc, (C, 1, K), jnp.float32) * (1.0 / np.sqrt(K))
    bconv = jax.random.normal(kbc, (C,), jnp.float32) * 0.1
    # Linear(n_inputs, n_inputs); init_weights(): normal(0, 0.01)
    wlin = jax.random.normal(kwl, (C, C), jnp.float32) * 0.01
    blin = jax.random.normal(kbl, (C,), jnp.float32) * 0.01

    out = lastblock_forward(x, wconv, bconv, wlin, blin, dilation=dilation)
    out = jax.block_until_ready(out)

    ref = _reference_forward(x, wconv, bconv, wlin, blin,
                             dilation=dilation, padding=padding)
    np.testing.assert_allclose(np.asarray(out), np.asarray(ref),
                               rtol=1e-5, atol=1e-5)
    print("KERNEL_OK")
</pallas_src>

<mosaic_0001>
module attributes {stable_mosaic.version = 11 : i64} {
  func.func @_lastblock_kernel(%arg0: i32, %arg1: memref<1x8x128xf32, #tpu.memory_space<vmem>>, %arg2: memref<8x3xf32, #tpu.memory_space<vmem>>, %arg3: memref<8x1xf32, #tpu.memory_space<vmem>>, %arg4: memref<8x8xf32, #tpu.memory_space<vmem>>, %arg5: memref<8x1xf32, #tpu.memory_space<vmem>>, %arg6: memref<1x8x128xf32, #tpu.memory_space<vmem>>) attributes {dimension_semantics = [#tpu.dimension_semantics<parallel>], iteration_bounds = array<i64: 2>, scalar_prefetch = 0 : i64, scratch_operands = 0 : i64, tpu.core_type = #tpu.core_type<tc>, window_params = [{transform_indices = @transform_0, window_bounds = array<i64: 1, 8, 128>}, {pipeline_mode = #tpu.pipeline_mode<synchronous>, transform_indices = @transform_1, window_bounds = array<i64: 8, 3>}, {pipeline_mode = #tpu.pipeline_mode<synchronous>, transform_indices = @transform_2, window_bounds = array<i64: 8, 1>}, {pipeline_mode = #tpu.pipeline_mode<synchronous>, transform_indices = @transform_3, window_bounds = array<i64: 8, 8>}, {pipeline_mode = #tpu.pipeline_mode<synchronous>, transform_indices = @transform_4, window_bounds = array<i64: 8, 1>}, {transform_indices = @transform_5, window_bounds = array<i64: 1, 8, 128>}]} {
    %c0 = arith.constant 0 : index
    %c0_0 = arith.constant 0 : index
    %0 = vector.load %arg2[%c0, %c0_0] : memref<8x3xf32, #tpu.memory_space<vmem>>, vector<8x3xf32>
    %c0_1 = arith.constant 0 : index
    %c0_2 = arith.constant 0 : index
    %1 = vector.load %arg3[%c0_1, %c0_2] : memref<8x1xf32, #tpu.memory_space<vmem>>, vector<8x1xf32>
    %2 = vector.shape_cast %1 : vector<8x1xf32> to vector<8x1xf32>
    %3 = vector.broadcast %2 : vector<8x1xf32> to vector<8x128xf32>
    %c0_3 = arith.constant 0 : index
    %c0_4 = arith.constant 0 : index
    %4 = vector.load %arg4[%c0_3, %c0_4] : memref<8x8xf32, #tpu.memory_space<vmem>>, vector<8x8xf32>
    %c0_5 = arith.constant 0 : index
    %c0_6 = arith.constant 0 : index
    %5 = vector.load %arg5[%c0_5, %c0_6] : memref<8x1xf32, #tpu.memory_space<vmem>>, vector<8x1xf32>
    %6 = tpu.iota {dimensions = array<i32: 1>} : vector<8x128xi32>
    %c0_7 = arith.constant 0 : index
    %c0_8 = arith.constant 0 : index
    %c0_9 = arith.constant 0 : index
    %7 = vector.load %arg1[%c0_7, %c0_8, %c0_9] : memref<1x8x128xf32, #tpu.memory_space<vmem>>, vector<1x8x128xf32>
    %8 = vector.shape_cast %7 : vector<1x8x128xf32> to vector<8x128xf32>
    %9 = vector.extract_strided_slice %0 {offsets = [0, 0], sizes = [8, 1], strides = [1, 1]} : vector<8x3xf32> to vector<8x1xf32>
    %c4_i32 = arith.constant 4 : i32
    %10 = tpu.dynamic_rotate %8 by %c4_i32 dim 1 : vector<8x128xf32>, i32 -> vector<8x128xf32>
    %c4_i32_10 = arith.constant 4 : i32
    %11 = vector.broadcast %c4_i32_10 : i32 to vector<8x128xi32>
    %12 = arith.cmpi slt, %6, %11 : vector<8x128xi32>
    %cst = arith.constant 0.000000e+00 : f32
    %13 = vector.broadcast %cst : f32 to vector<8x128xf32>
    %14 = arith.select %12, %13, %10 : vector<8x128xi1>, vector<8x128xf32>
    %15 = vector.broadcast %9 : vector<8x1xf32> to vector<8x128xf32>
    %16 = arith.mulf %15, %14 : vector<8x128xf32>
    %17 = arith.addf %3, %16 : vector<8x128xf32>
    %18 = vector.extract_strided_slice %0 {offsets = [0, 1], sizes = [8, 1], strides = [1, 1]} : vector<8x3xf32> to vector<8x1xf32>
    %c2_i32 = arith.constant 2 : i32
    %19 = tpu.dynamic_rotate %8 by %c2_i32 dim 1 : vector<8x128xf32>, i32 -> vector<8x128xf32>
    %c2_i32_11 = arith.constant 2 : i32
    %20 = vector.broadcast %c2_i32_11 : i32 to vector<8x128xi32>
    %21 = arith.cmpi slt, %6, %20 : vector<8x128xi32>
    %cst_12 = arith.constant 0.000000e+00 : f32
    %22 = vector.broadcast %cst_12 : f32 to vector<8x128xf32>
    %23 = arith.select %21, %22, %19 : vector<8x128xi1>, vector<8x128xf32>
    %24 = vector.broadcast %18 : vector<8x1xf32> to vector<8x128xf32>
    %25 = arith.mulf %24, %23 : vector<8x128xf32>
    %26 = arith.addf %17, %25 : vector<8x128xf32>
    %27 = vector.extract_strided_slice %0 {offsets = [0, 2], sizes = [8, 1], strides = [1, 1]} : vector<8x3xf32> to vector<8x1xf32>
    %cst_13 = arith.constant 1.000000e+00 : f32
    %28 = vector.broadcast %cst_13 : f32 to vector<8x1xf32>
    %29 = arith.addf %27, %28 : vector<8x1xf32>
    %30 = vector.broadcast %29 : vector<8x1xf32> to vector<8x128xf32>
    %31 = arith.mulf %30, %8 : vector<8x128xf32>
    %32 = arith.addf %26, %31 : vector<8x128xf32>
    %cst_14 = arith.constant dense<0.000000e+00> : vector<8x128xf32>
    %33 = tpu.matmul %4, %32, %cst_14 {dimension_numbers = #tpu.dot_dimension_numbers<[1], [0], [0], [1], [0, 0, 1, 1], [], []>} : vector<8x8xf32>, vector<8x128xf32>, vector<8x128xf32> -> vector<8x128xf32>
    %34 = vector.broadcast %5 : vector<8x1xf32> to vector<8x128xf32>
    %35 = arith.addf %33, %34 : vector<8x128xf32>
    %c0_15 = arith.constant 0 : index
    %c0_16 = arith.constant 0 : index
    %c0_17 = arith.constant 0 : index
    %36 = vector.load %arg6[%c0_15, %c0_16, %c0_17] : memref<1x8x128xf32, #tpu.memory_space<vmem>>, vector<1x8x128xf32>
    %37 = vector.shape_cast %36 : vector<1x8x128xf32> to vector<8x128xf32>
    %38 = vector.shape_cast %35 : vector<8x128xf32> to vector<1x8x128xf32>
    tpu.vector_store %arg6[%c0_15, %c0_16, %c0_17], %38 {strides = array<i32>} : memref<1x8x128xf32, #tpu.memory_space<vmem>>, vector<1x8x128xf32>,
    return
  }
  func.func @transform_0(%arg0: i32) -> (i32, i32, i32) {
    %c0_i32 = arith.constant 0 : i32
    %c0_i32_0 = arith.constant 0 : i32
    %c0_i32_1 = arith.constant 0 : i32
    return %arg0, %c0_i32, %c0_i32_0 : i32, i32, i32
  }
  func.func @transform_1(%arg0: i32) -> (i32, i32) {
    %c0_i32 = arith.constant 0 : i32
    %c0_i32_0 = arith.constant 0 : i32
    %c0_i32_1 = arith.constant 0 : i32
    return %c0_i32, %c0_i32_0 : i32, i32
  }
  func.func @transform_2(%arg0: i32) -> (i32, i32) {
    %c0_i32 = arith.constant 0 : i32
    %c0_i32_0 = arith.constant 0 : i32
    %c0_i32_1 = arith.constant 0 : i32
    return %c0_i32, %c0_i32_0 : i32, i32
  }
  func.func @transform_3(%arg0: i32) -> (i32, i32) {
    %c0_i32 = arith.constant 0 : i32
    %c0_i32_0 = arith.constant 0 : i32
    %c0_i32_1 = arith.constant 0 : i32
    return %c0_i32, %c0_i32_0 : i32, i32
  }
  func.func @transform_4(%arg0: i32) -> (i32, i32) {
    %c0_i32 = arith.constant 0 : i32
    %c0_i32_0 = arith.constant 0 : i32
    %c0_i32_1 = arith.constant 0 : i32
    return %c0_i32, %c0_i32_0 : i32, i32
  }
  func.func @transform_5(%arg0: i32) -> (i32, i32, i32) {
    %c0_i32 = arith.constant 0 : i32
    %c0_i32_0 = arith.constant 0 : i32
    %c0_i32_1 = arith.constant 0 : i32
    return %arg0, %c0_i32, %c0_i32_0 : i32, i32, i32
  }
}

</mosaic_0001>

<llo_original>
// kernel: tpu_custom_call.1
$region0: #{tpu_custom_call.1}
  #allocation0 [shape = 'u32[]', space=smem, size = 0x4, offset = 0x4, fixed_abs, tag = 'smem constant byte address 0x4 - core index']
  #allocation1 [shape = 'u32[144,128]{1,0:T(1,128)}', space=vmem, size = 0x12000, scoped, tag = 'internal scratch']
  %s0 = inlined_call_operand.vmem [shape: f32[2,8,128], index: 0, kind: input, shape index: {}]
  %s1 = inlined_call_operand.vmem [shape: f32[8,3], index: 1, kind: input, shape index: {}]
  %s2 = inlined_call_operand.vmem [shape: f32[8,1], index: 2, kind: input, shape index: {}]
  %s3 = inlined_call_operand.vmem [shape: f32[8,8], index: 3, kind: input, shape index: {}]
  %s4 = inlined_call_operand.vmem [shape: f32[8,1], index: 4, kind: input, shape index: {}]
  %s5 = inlined_call_operand.hbm [shape: f32[2,8,128], index: 5, kind: output, shape index: {}]
  %s6 = sld [smem:[#allocation0]]
  $region53: #{tpu_custom_call.1} parent=0
    _
  %s8 = ssub.s32 1, %s6
  %s9 = scalar_select 0, %s8, %s6
  $region1: #{tpu_custom_call.1} parent=0
    #allocation2 [shape = 'u8[8192]{0}', space=vmem, size = 0x2000, scoped, tag = 'output window, operand 0']
    #allocation3 [shape = 's32[2]{0}', space=sflag, size = 0x8, scoped, tag = 'scoped memory for tpu_custom_call.1']
    %10 = vsyncpa [#allocation3], 0
    %s11 = scalar_lea.sflag [#allocation3], 1
    %12 = vsyncpa %s11, 0
    loop: start=0, step=1, limit=4
    $region2: #{tpu_custom_call.1} parent=1 // loop_pre_header
      _
    $region3: #{tpu_custom_call.1} parent=1 // loop_header
      %s14 = sphi 0, %s18
      %p15 = scmp.ge.s32.totalorder %s14, 4
      %s24 = sphi 0, %s26
      %s27 = sphi 0, %s24
      %s28 = sphi 0, %s27
      %s44 = sphi 0, %s28
      %s48 = sphi 0, %s48
      %s50 = sphi 0, %s48
      %s51 = sphi 0, %s50
      %s65 = sphi 0, %s51
      %s69 = sphi 0, %s69
      %s71 = sphi 0, %s69
      %s72 = sphi 0, %s71
      %s86 = sphi 0, %s72
      %s90 = sphi 0, %s90
      %s92 = sphi 0, %s90
      %s93 = sphi 0, %s92
      %s107 = sphi 0, %s93
      %s111 = sphi 0, %s111
      %s113 = sphi 0, %s111
      %s114 = sphi 0, %s113
      %s128 = sphi 0, %s114
      %s134 = sphi 0, %s136
      %s137 = sphi 0, %s134
      %s138 = sphi 0, %s137
      %s154 = sphi 0, %s138
    $region4: #{tpu_custom_call.1} parent=1 // loop_header_branch
      %17 = sbr.rel (%p15) target = $region8
    $region5: #{tpu_custom_call.1} parent=1 // loop_body
      %s19 = ssub.s32 %s14, 1
      %s20 = ssub.s32 %s14, 2
      %s21 = sadd.s32 %s14, 1
      %s22 = ssub.s32 %s14, %s21
      %p23 = scmp.eq.s32.totalorder %s22, 0
      %s25 = sadd.s32 %s24, 1
      %s26 = scalar_select %p23, %s24, %s25
      %p29 = pneg %p23
      %p30 = scmp.eq.s32.totalorder %s14, 1
      %p31 = por %p29, %p30
      %p32 = scmp.ne.s32.totalorder %s24, %s27
      %p33 = scmp.eq.s32.totalorder %s14, 0
      %p34 = por %p32, %p33
      %p35 = scmp.ne.s32.totalorder %s24, %s27
      %p36 = scmp.eq.s32.totalorder %s19, 1
      %p37 = por %p35, %p36
      %p38 = scmp.ne.s32.totalorder %s27, %s28
      %p39 = scmp.eq.s32.totalorder %s19, 0
      %p40 = por %p38, %p39
      %p41 = scmp.ne.s32.totalorder %s27, %s28
      %p42 = scmp.eq.s32.totalorder %s20, 1
      %p43 = por %p41, %p42
      %p45 = scmp.ne.s32.totalorder %s28, %s44
      %p46 = scmp.eq.s32.totalorder %s20, 0
      %p47 = por %p45, %p46
      %s49 = sadd.s32 %s48, 1
      %p52 = scmp.eq.s32.totalorder %s14, 1
      %p53 = scmp.ne.s32.totalorder %s48, %s50
      %p54 = scmp.eq.s32.totalorder %s14, 0
      %p55 = por %p53, %p54
      %p56 = scmp.ne.s32.totalorder %s48, %s50
      %p57 = scmp.eq.s32.totalorder %s19, 1
      %p58 = por %p56, %p57
      %p59 = scmp.ne.s32.totalorder %s50, %s51
      %p60 = scmp.eq.s32.totalorder %s19, 0
      %p61 = por %p59, %p60
      %p62 = scmp.ne.s32.totalorder %s50, %s51
      %p63 = scmp.eq.s32.totalorder %s20, 1
      %p64 = por %p62, %p63
      %p66 = scmp.ne.s32.totalorder %s51, %s65
      %p67 = scmp.eq.s32.totalorder %s20, 0
      %p68 = por %p66, %p67
      %s70 = sadd.s32 %s69, 1
      %p73 = scmp.eq.s32.totalorder %s14, 1
      %p74 = scmp.ne.s32.totalorder %s69, %s71
      %p75 = scmp.eq.s32.totalorder %s14, 0
      %p76 = por %p74, %p75
      %p77 = scmp.ne.s32.totalorder %s69, %s71
      %p78 = scmp.eq.s32.totalorder %s19, 1
      %p79 = por %p77, %p78
      %p80 = scmp.ne.s32.totalorder %s71, %s72
      %p81 = scmp.eq.s32.totalorder %s19, 0
      %p82 = por %p80, %p81
      %p83 = scmp.ne.s32.totalorder %s71, %s72
      %p84 = scmp.eq.s32.totalorder %s20, 1
      %p85 = por %p83, %p84
      %p87 = scmp.ne.s32.totalorder %s72, %s86
      %p88 = scmp.eq.s32.totalorder %s20, 0
      %p89 = por %p87, %p88
      %s91 = sadd.s32 %s90, 1
      %p94 = scmp.eq.s32.totalorder %s14, 1
      %p95 = scmp.ne.s32.totalorder %s90, %s92
      %p96 = scmp.eq.s32.totalorder %s14, 0
      %p97 = por %p95, %p96
      %p98 = scmp.ne.s32.totalorder %s90, %s92
      %p99 = scmp.eq.s32.totalorder %s19, 1
      %p100 = por %p98, %p99
      %p101 = scmp.ne.s32.totalorder %s92, %s93
      %p102 = scmp.eq.s32.totalorder %s19, 0
      %p103 = por %p101, %p102
      %p104 = scmp.ne.s32.totalorder %s92, %s93
      %p105 = scmp.eq.s32.totalorder %s20, 1
      %p106 = por %p104, %p105
      %p108 = scmp.ne.s32.totalorder %s93, %s107
      %p109 = scmp.eq.s32.totalorder %s20, 0
      %p110 = por %p108, %p109
      %s112 = sadd.s32 %s111, 1
      %p115 = scmp.eq.s32.totalorder %s14, 1
      %p116 = scmp.ne.s32.totalorder %s111, %s113
      %p117 = scmp.eq.s32.totalorder %s14, 0
      %p118 = por %p116, %p117
      %p119 = scmp.ne.s32.totalorder %s111, %s113
      %p120 = scmp.eq.s32.totalorder %s19, 1
      %p121 = por %p119, %p120
      %p122 = scmp.ne.s32.totalorder %s113, %s114
      %p123 = scmp.eq.s32.totalorder %s19, 0
      %p124 = por %p122, %p123
      %p125 = scmp.ne.s32.totalorder %s113, %s114
      %p126 = scmp.eq.s32.totalorder %s20, 1
      %p127 = por %p125, %p126
      %p129 = scmp.ne.s32.totalorder %s114, %s128
      %p130 = scmp.eq.s32.totalorder %s20, 0
      %p131 = por %p129, %p130
      %s132 = ssub.s32 %s14, %s21
      %p133 = scmp.eq.s32.totalorder %s132, 0
      %s135 = sadd.s32 %s134, 1
      %s136 = scalar_select %p133, %s134, %s135
      %p139 = pneg %p133
      %p140 = scmp.eq.s32.totalorder %s14, 1
      %p141 = por %p139, %p140
      %p142 = scmp.ne.s32.totalorder %s134, %s137
      %p143 = scmp.eq.s32.totalorder %s14, 0
      %p144 = por %p142, %p143
      %p145 = scmp.ne.s32.totalorder %s134, %s137
      %p146 = scmp.eq.s32.totalorder %s19, 1
      %p147 = por %p145, %p146
      %p148 = scmp.ne.s32.totalorder %s137, %s138
      %p149 = scmp.eq.s32.totalorder %s19, 0
      %p150 = por %p148, %p149
      %p151 = scmp.ne.s32.totalorder %s137, %s138
      %p152 = scmp.eq.s32.totalorder %s20, 1
      %p153 = por %p151, %p152
      %p155 = scmp.ne.s32.totalorder %s138, %s154
      %p156 = scmp.eq.s32.totalorder %s20, 0
      %p157 = por %p155, %p156
      %p158 = scmp.le.s32.totalorder 1, %s14
      %p159 = scmp.lt.s32.totalorder %s14, 3
      %p160 = pnand %p158, %p159
      %p161 = pneg %p160
      // Predicated region
      $region9: #{tpu_custom_call.1} parent=5 // pred_check
        _
      $region10: #{tpu_custom_call.1} parent=5 // pred_check_branch
        %163 = sbr.rel (%p160) target = $region12
      $region11: #{tpu_custom_call.1} parent=5 // pred_region
        %s164 = ssub.s32 %s14, 1
        // Predicated region
        $region13: #{tpu_custom_call.1} parent=11 // pred_check
          %p165 = pneg %p61
        $region14: #{tpu_custom_call.1} parent=11 // pred_check_branch
          %167 = sbr.rel (%p165) target = $region16
        $region15: #{tpu_custom_call.1} parent=11 // pred_region
          _
        $region16: #{tpu_custom_call.1} parent=11 // pred_fallthru
          _
        // Predicated region
        $region17: #{tpu_custom_call.1} parent=11 // pred_check
          %p168 = pneg %p82
        $region18: #{tpu_custom_call.1} parent=11 // pred_check_branch
          %170 = sbr.rel (%p168) target = $region20
        $region19: #{tpu_custom_call.1} parent=11 // pred_region
          _
        $region20: #{tpu_custom_call.1} parent=11 // pred_fallthru
          _
        // Predicated region
        $region21: #{tpu_custom_call.1} parent=11 // pred_check
          %p171 = pneg %p103
        $region22: #{tpu_custom_call.1} parent=11 // pred_check_branch
          %173 = sbr.rel (%p171) target = $region24
        $region23: #{tpu_custom_call.1} parent=11 // pred_region
          _
        $region24: #{tpu_custom_call.1} parent=11 // pred_fallthru
          _
        // Predicated region
        $region25: #{tpu_custom_call.1} parent=11 // pred_check
          %p174 = pneg %p124
        $region26: #{tpu_custom_call.1} parent=11 // pred_check_branch
          %176 = sbr.rel (%p174) target = $region28
        $region27: #{tpu_custom_call.1} parent=11 // pred_region
          _
        $region28: #{tpu_custom_call.1} parent=11 // pred_fallthru
          _
      $region12: #{tpu_custom_call.1} parent=5 // pred_fallthru
        _
      %p177 = scmp.lt.s32.totalorder %s14, 2
      // Predicated region
      $region29: #{tpu_custom_call.1} parent=5 // pred_check
        %p178 = pneg %p177
      $region30: #{tpu_custom_call.1} parent=5 // pred_check_branch
        %180 = sbr.rel (%p178) target = $region32
      $region31: #{tpu_custom_call.1} parent=5 // pred_region
        // Predicated region
        $region33: #{tpu_custom_call.1} parent=31 // pred_check
          %p181 = pneg %p34
        $region34: #{tpu_custom_call.1} parent=31 // pred_check_branch
          %183 = sbr.rel (%p181) target = $region36
        $region35: #{tpu_custom_call.1} parent=31 // pred_region
          %p184 = scmp.lt.s32.totalorder %s14, 1
          %s185 = scalar_select %p184, %s14, 1
          %s186 = smul.addr %s185, 8
          %s187 = scalar_lea.vmem %s0, %s186
        $region36: #{tpu_custom_call.1} parent=31 // pred_fallthru
          _
      $region32: #{tpu_custom_call.1} parent=5 // pred_fallthru
        _
      %p188 = scmp.le.s32.totalorder 1, %s14
      %p189 = scmp.lt.s32.totalorder %s14, 3
      %p190 = pnand %p188, %p189
      %p191 = pneg %p190
      // Predicated region
      $region37: #{tpu_custom_call.1} parent=5 // pred_check
        _
      $region38: #{tpu_custom_call.1} parent=5 // pred_check_branch
        %193 = sbr.rel (%p190) target = $region40
      $region39: #{tpu_custom_call.1} parent=5 // pred_region
        %s194 = ssub.s32 %s14, 1
        %p195 = scmp.lt.s32.totalorder %s19, 1
        %s196 = scalar_select %p195, %s19, 1
        %s197 = smul.addr %s196, 8
        %s198 = scalar_lea.vmem %s0, %s197
        %p199 = pneg %p40
        %p200 = pneg %p37
        %p201 = pneg %p61
        %p202 = pneg %p58
        %p203 = pneg %p82
        %p204 = pneg %p79
        %p205 = pneg %p103
        %p206 = pneg %p100
        %p207 = pneg %p124
        %p208 = pneg %p121
        %p209 = pneg %p150
        %p210 = pneg %p147
        %s211 = sand.u32 %s137, 1
        %s212 = scalar_lea.sflag [#allocation3], %s211
        %s213 = sand.u32 %s137, 1
        %s214 = smul.addr %s213, 8
        %s215 = scalar_lea.vmem [#allocation2], %s214
        %p216 = scmp.lt.s32.totalorder %s19, 1
        %s217 = scalar_select %p216, %s19, 1
        %s218 = smul.addr %s217, 8
        %s219 = scalar_lea.vmem %s0, %s218
        %v220 = vld [vmem:[%s1] sm:$0xff]
        %v221 = vld [vmem:[%s2] sm:$0xff]
        %223 = vset.pattern.permute.xlu0 0
        %224 = vperm.xlu0 %223, %v221
        %v225 = vpop.permute.xlu0 %224
        %v227 = vld [vmem:[%s3] sm:$0xff]
        %v228 = vld [vmem:[%s4] sm:$0xff]
        %v229 = vlaneseq
        %v230 = vand.u32 %v229, 127
        %v231 = vld [vmem:[%s219] sm:$0xff]
        %232 = vrot.lane.b32.xlu0 %v231, 4
        %v233 = vpop.permute.xlu0 %232
        %vm234 = vcmp.lt.s32.totalorder %v230, 4
        %v235 = vsel %vm234, 0.0, %v233
        %237 = vset.pattern.permute.xlu0 0
        %238 = vperm.xlu0 %237, %v220
        %v239 = vpop.permute.xlu0 %238
        %v241 = vmul.f32 %v239, %v235
        %v242 = vadd.f32 %v225, %v241
        %243 = vrot.lane.b32.xlu0 %v231, 2
        %v244 = vpop.permute.xlu0 %243
        %vm245 = vcmp.lt.s32.totalorder %v230, 2
        %v246 = vsel %vm245, 0.0, %v244
        %247 = vset.pattern.permute.xlu0 1
        %248 = vperm.xlu0 %247, %v220
        %v249 = vpop.permute.xlu0 %248
        %v251 = vmul.f32 %v249, %v246
        %v252 = vadd.f32 %v242, %v251
        %v253 = vadd.f32 %v220, 1.0
        %255 = vset.pattern.permute.xlu0 2
        %256 = vperm.xlu0 %255, %v253
        %v257 = vpop.permute.xlu0 %256
        %v259 = vmul.f32 %v257, %v231
        %v260 = vadd.f32 %v252, %v259
        %262 = vset.pattern.permute.xlu0 0
        %263 = vperm.xlu0 %262, %v228
        %v264 = vpop.permute.xlu0 %263
        %vm266 = vcmask 64512
        %v268 = vsel %vm266, %v227, 0
        %270 = vmatprep.subr.mxu0 0.0
        %271 = vmatpush1.msra.mxu0 %v260
        %272 = vmatprep.subr.mxu0 0.0
        %273 = vmatpush1.msra.mxu0 0.0
        %274 = vmatprep.subr.mxu0 0.0
        %275 = vmatpush1.msra.mxu0 0.0
        %276 = vmatprep.subr.mxu0 0.0
        %277 = vmatpush1.msra.mxu0 0.0
        %278 = vmatprep.subr.mxu0 0.0
        %279 = vmatpush1.msra.mxu0 0.0
        %280 = vmatprep.subr.mxu0 0.0
        %281 = vmatpush1.msra.mxu0 0.0
        %282 = vmatprep.subr.mxu0 0.0
        %283 = vmatpush1.msra.mxu0 0.0
        %284 = vmatprep.subr.mxu0 0.0
        %285 = vmatpush1.msra.mxu0 0.0
        %286 = vmatprep.subr.mxu0 0.0
        %287 = vmatpush1.msra.mxu0 0.0
        %288 = vmatprep.subr.mxu0 0.0
        %289 = vmatpush1.msra.mxu0 0.0
        %290 = vmatprep.subr.mxu0 0.0
        %291 = vmatpush1.msra.mxu0 0.0
        %292 = vmatprep.subr.mxu0 0.0
        %293 = vmatpush1.msra.mxu0 0.0
        %294 = vmatprep.subr.mxu0 0.0
        %295 = vmatpush1.msra.mxu0 0.0
        %296 = vmatprep.subr.mxu0 0.0
        %297 = vmatpush1.msra.mxu0 0.0
        %298 = vmatprep.subr.mxu0 0.0
        %299 = vmatpush1.msra.mxu0 0.0
        %300 = vmatprep.subr.mxu0 0.0
        %301 = vmatpush1.msra.mxu0 0.0
        %302 = vmatprep.subr.mxu0 0.0
        %303 = vmatpush1.msra.mxu0 0.0
        %304 = vmatprep.subr.mxu0 0.0
        %305 = vmatpush1.msra.mxu0 0.0
        %306 = vmatprep.subr.mxu0 0.0
        %307 = vmatpush1.msra.mxu0 0.0
        %308 = vmatprep.subr.mxu0 0.0
        %309 = vmatpush1.msra.mxu0 0.0
        %310 = vmatprep.subr.mxu0 0.0
        %311 = vmatpush1.msra.mxu0 0.0
        %312 = vmatprep.subr.mxu0 0.0
        %313 = vmatpush1.msra.mxu0 0.0
        %314 = vmatprep.subr.mxu0 0.0
        %315 = vmatpush1.msra.mxu0 0.0
        %316 = vmatprep.subr.mxu0 0.0
        %317 = vmatpush1.msra.mxu0 0.0
        %318 = vmatprep.subr.mxu0 0.0
        %319 = vmatpush1.msra.mxu0 0.0
        %320 = vmatprep.subr.mxu0 0.0
        %321 = vmatpush1.msra.mxu0 0.0
        %322 = vmatprep.subr.mxu0 0.0
        %323 = vmatpush1.msra.mxu0 0.0
        %324 = vmatprep.subr.mxu0 0.0
        %325 = vmatpush1.msra.mxu0 0.0
        %326 = vmatprep.subr.mxu0 0.0
        %327 = vmatpush1.msra.mxu0 0.0
        %328 = vmatprep.subr.mxu0 0.0
        %329 = vmatpush1.msra.mxu0 0.0
        %330 = vmatprep.subr.mxu0 0.0
        %331 = vmatpush1.msra.mxu0 0.0
        %332 = vmatprep.subr.mxu0 0.0
        %333 = vmatpush1.msra.mxu0 0.0
        %334 = vmatprep.mubr.f32.mxu0 0.0
        %335 = vmatmul.mubr.f32.gmra.mrb[0].mxu0 %v268
        %v336 = vpop.f32.mrb[0].mxu0
        %v337 = vadd.f32 %v264, %v336
        %v338 = vpop.f32.mrb[0].mxu0
        %339 = vdwg.mxu0
        %340 = vst [vmem:[%s215] sm:$0xff] %v337
        %s341 = sand.u32 %s137, 1
        %s342 = scalar_lea.sflag [#allocation3], %s341
        %s343 = sand.u32 %s137, 1
        %s344 = smul.addr %s343, 8
        %s345 = scalar_lea.vmem [#allocation2], %s344
        // Predicated region
        $region41: #{tpu_custom_call.1} parent=39 // pred_check
          %p346 = pneg %p147
        $region42: #{tpu_custom_call.1} parent=39 // pred_check_branch
          %348 = sbr.rel (%p346) target = $region44
        $region43: #{tpu_custom_call.1} parent=39 // pred_region
          %s350 = ssub.s32 128, 128
          %351 = vsyncadd %s342, %s350
          %s352 = smul.addr %s19, 128
          %s353 = scalar_lea.hbm %s5, %s352
          %s355 = sshll.u32 %s345, 4
          %s356 = int_to_ptr.vmem [resolvable:$true] %s355
          %358 = dma.vmem_to_hbm [thread:$0]  %s356, 128, %s353, %s342
        $region44: #{tpu_custom_call.1} parent=39 // pred_fallthru
          _
      $region40: #{tpu_custom_call.1} parent=5 // pred_fallthru
        _
      %p359 = scmp.le.s32.totalorder 2, %s14
      // Predicated region
      $region45: #{tpu_custom_call.1} parent=5 // pred_check
        %p360 = pneg %p359
      $region46: #{tpu_custom_call.1} parent=5 // pred_check_branch
        %362 = sbr.rel (%p360) target = $region48
      $region47: #{tpu_custom_call.1} parent=5 // pred_region
        %s363 = ssub.s32 %s14, 2
        // Predicated region
        $region49: #{tpu_custom_call.1} parent=47 // pred_check
          %p364 = pneg %p153
        $region50: #{tpu_custom_call.1} parent=47 // pred_check_branch
          %366 = sbr.rel (%p364) target = $region52
        $region51: #{tpu_custom_call.1} parent=47 // pred_region
          %s367 = sand.u32 %s138, 1
          %s368 = scalar_lea.sflag [#allocation3], %s367
          %s369 = sand.u32 %s138, 1
          %s370 = smul.addr %s369, 8
          %s371 = scalar_lea.vmem [#allocation2], %s370
          %372 = dma.done %s368, 128
        $region52: #{tpu_custom_call.1} parent=47 // pred_fallthru
          _
      $region48: #{tpu_custom_call.1} parent=5 // pred_fallthru
        _
    $region6: #{tpu_custom_call.1} parent=1 // loop_footer
      %s18 = sadd.s32 1, %s14
    $region7: #{tpu_custom_call.1} parent=1 // loop_footer_branch
      %13 = sbr.rel target = $region3
    $region8: #{tpu_custom_call.1} parent=1 // loop_exit
      _
    %373 = vsyncpa [#allocation3], 1
    %s374 = scalar_lea.sflag [#allocation3], 1
    %375 = vsyncpa %s374, 1

</llo_original>
